<compile_context>
chip_gen: v7x
topology: tpu7x:2x2x1
jax: 0.10.0
libtpu: 0.0.40
codegen_flags: <defaults>
</compile_context>

<pallas_src>
import jax
import jax.numpy as jnp
import numpy as np
from jax.experimental import pallas as pl
from jax.experimental.pallas import tpu as pltpu


# ------------------------------ Pallas kernel -------------------------------

def _recurrent_block_kernel(x_ref, w_ref, sc_ref, sh_ref, o_ref, xp_ref):
    # x_ref : (1, H, WC)   input tile in lane-dense (H, W*C) layout
    # w_ref : (3*WC, WC)   banded conv weights (3 vertical taps stacked on K)
    # sc_ref: (2, WC)      per-lane BN scale; row 1 already contains the 2x fold
    # sh_ref: (1, WC)      per-lane BN shift (conv bias folded in)
    # o_ref : (1, H, WC)   output tile
    # xp_ref: (H+2, WC)    VMEM scratch: vertically zero-padded activations
    H = o_ref.shape[1]
    WC = o_ref.shape[2]

    # Zero the vertical halo rows once (the interior is rewritten per conv).
    zero_row = jnp.zeros((1, WC), jnp.float32)
    xp_ref[0:1, :] = zero_row
    xp_ref[H + 1:H + 2, :] = zero_row

    def conv_bn_relu(inp, scale):
        # inp: (H, WC) activations; scale: (1, WC)
        xp_ref[1:H + 1, :] = inp
        # One im2col-style matmul per conv: concatenate the 3 row-shifted
        # views (K = 3*WC) and hit the MXU once.
        xcat = jnp.concatenate(
            [xp_ref[0:H, :], xp_ref[1:H + 1, :], xp_ref[2:H + 2, :]], axis=1)
        acc = jnp.dot(xcat, w_ref[...], preferred_element_type=jnp.float32)
        return jnp.maximum(acc * scale + sh_ref[...], 0.0)

    a = conv_bn_relu(x_ref[0], sc_ref[0:1, :])      # conv(x)
    o_ref[0] = conv_bn_relu(a, sc_ref[1:2, :])      # conv(x + x): 2x folded in scale


# ------------------------------ module wrapper -------------------------------

def recurrent_block_forward(x_nchw, kp):
    """Forward of Recurrent_block(out_ch, t=2) on an NCHW input."""
    N, C, H, W = x_nchw.shape
    WC = W * C
    # NCHW -> NHWC -> lane-dense (N, H, W*C).  (Best perf when W*C % 128 == 0.)
    x = jnp.transpose(x_nchw, (0, 2, 3, 1)).reshape(N, H, WC).astype(jnp.float32)

    out = pl.pallas_call(
        _recurrent_block_kernel,
        out_shape=jax.ShapeDtypeStruct((N, H, WC), jnp.float32),
        grid=(N,),
        in_specs=[
            pl.BlockSpec((1, H, WC), lambda n: (n, 0, 0)),
            pl.BlockSpec((3 * WC, WC), lambda n: (0, 0)),
            pl.BlockSpec((2, WC), lambda n: (0, 0)),
            pl.BlockSpec((1, WC), lambda n: (0, 0)),
        ],
        out_specs=pl.BlockSpec((1, H, WC), lambda n: (n, 0, 0)),
        scratch_shapes=[pltpu.VMEM((H + 2, WC), jnp.float32)],
        compiler_params=pltpu.CompilerParams(
            dimension_semantics=("parallel",)),
    )(x, kp['w_banded'], kp['scale'], kp['shift'])

    return jnp.transpose(out.reshape(N, H, W, C), (0, 3, 1, 2))   # back to NCHW


# ------------------------- parameter folding (wrapper) -----------------------

def fold_params(raw, W, eps=1e-5):
    """Fold conv bias + BN into per-lane scale/shift and build the banded
    block-Toeplitz conv weight that absorbs the horizontal taps + padding."""
    w3 = raw['w']                       # (3, 3, Cin, Cout) in HWIO
    Cin, Cout = w3.shape[2], w3.shape[3]

    s = raw['gamma'] / jnp.sqrt(raw['var'] + eps)
    shift = s * (raw['b'] - raw['mean']) + raw['beta']

    # sel[dw, w_in, w_out] = 1  iff  w_in == w_out + dw - 1 is a valid column
    sel = np.zeros((3, W, W), np.float32)
    for dw in range(3):
        for wo in range(W):
            wi = wo + dw - 1
            if 0 <= wi < W:
                sel[dw, wi, wo] = 1.0

    # banded[dh, w_in*Cin+ci, w_out*Cout+co] = w3[dh, w_in-w_out+1, ci, co]
    banded = jnp.einsum('dxw,hdio->hxiwo', jnp.asarray(sel), w3)
    banded = banded.reshape(3 * W * Cin, W * Cout)

    scale = jnp.stack([jnp.tile(s, W), jnp.tile(2.0 * s, W)], axis=0)  # (2, W*C)
    shift_row = jnp.tile(shift, W).reshape(1, W * Cout)                # (1, W*C)
    return dict(w_banded=banded, scale=scale, shift=shift_row)


# ----------------------------- pure-JAX reference ----------------------------

def reference_forward(x_nchw, raw, t=2, eps=1e-5):
    """Literal translation of the PyTorch Recurrent_block.forward loop."""
    x = jnp.transpose(x_nchw, (0, 2, 3, 1)).astype(jnp.float32)

    def conv_bn_relu(u):
        z = jax.lax.conv_general_dilated(
            u, raw['w'], (1, 1), 'SAME',
            dimension_numbers=('NHWC', 'HWIO', 'NHWC'),
            precision=jax.lax.Precision.HIGHEST) + raw['b']
        z = raw['gamma'] * (z - raw['mean']) / jnp.sqrt(raw['var'] + eps) \
            + raw['beta']
        return jnp.maximum(z, 0.0)

    out = None
    for i in range(t):
        if i == 0:
            x = conv_bn_relu(x)
        out = conv_bn_relu(x + x)
    return jnp.transpose(out, (0, 3, 1, 2))


# ----------------------------------- main ------------------------------------

if __name__ == "__main__":
    # Recurrent_block requires in_ch == out_ch; pick C=8, W=16 so W*C = 128
    # lanes (fully lane-dense stores).
    N, C, H, W = 2, 8, 16, 16

    key = jax.random.PRNGKey(0)
    kx, kw, kb, kg, kbt, km, kv = jax.random.split(key, 7)
    x = jax.random.normal(kx, (N, C, H, W), jnp.float32)       # NCHW like PyTorch
    raw = dict(
        w=0.2 * jax.random.normal(kw, (3, 3, C, C), jnp.float32),   # HWIO
        b=0.1 * jax.random.normal(kb, (C,), jnp.float32),
        gamma=1.0 + 0.1 * jax.random.normal(kg, (C,), jnp.float32),
        beta=0.1 * jax.random.normal(kbt, (C,), jnp.float32),
        mean=0.1 * jax.random.normal(km, (C,), jnp.float32),
        var=jax.random.uniform(kv, (C,), jnp.float32, 0.5, 1.5),
    )
    kp = fold_params(raw, W)

    fwd = jax.jit(recurrent_block_forward)
    out = jax.block_until_ready(fwd(x, kp))

    assert out.shape == (N, C, H, W)
    ref = reference_forward(x, raw)
    max_err = float(jnp.max(jnp.abs(out - ref)))
    assert jnp.allclose(out, ref, rtol=1e-3, atol=1e-3), max_err

    print("KERNEL_OK")
</pallas_src>

<mosaic_0001>
module attributes {stable_mosaic.version = 11 : i64} {
  func.func @_recurrent_block_kernel(%arg0: i32, %arg1: memref<1x16x128xf32, #tpu.memory_space<vmem>>, %arg2: memref<384x128xf32, #tpu.memory_space<vmem>>, %arg3: memref<2x128xf32, #tpu.memory_space<vmem>>, %arg4: memref<1x128xf32, #tpu.memory_space<vmem>>, %arg5: memref<1x16x128xf32, #tpu.memory_space<vmem>>, %arg6: memref<18x128xf32, #tpu.memory_space<vmem>>) attributes {dimension_semantics = [#tpu.dimension_semantics<parallel>], iteration_bounds = array<i64: 2>, scalar_prefetch = 0 : i64, scratch_operands = 1 : i64, tpu.core_type = #tpu.core_type<tc>, window_params = [{transform_indices = @transform_0, window_bounds = array<i64: 1, 16, 128>}, {pipeline_mode = #tpu.pipeline_mode<synchronous>, transform_indices = @transform_1, window_bounds = array<i64: 384, 128>}, {pipeline_mode = #tpu.pipeline_mode<synchronous>, transform_indices = @transform_2, window_bounds = array<i64: 2, 128>}, {pipeline_mode = #tpu.pipeline_mode<synchronous>, transform_indices = @transform_3, window_bounds = array<i64: 1, 128>}, {transform_indices = @transform_4, window_bounds = array<i64: 1, 16, 128>}]} {
    %cst = arith.constant 0.000000e+00 : f32
    %0 = vector.broadcast %cst : f32 to vector<1x128xf32>
    %c0 = arith.constant 0 : index
    %c0_0 = arith.constant 0 : index
    %1 = vector.load %arg6[%c0, %c0_0] : memref<18x128xf32, #tpu.memory_space<vmem>>, vector<1x128xf32>
    tpu.vector_store %arg6[%c0, %c0_0], %0 {strides = array<i32>} : memref<18x128xf32, #tpu.memory_space<vmem>>, vector<1x128xf32>,
    %c17 = arith.constant 17 : index
    %c0_1 = arith.constant 0 : index
    %2 = vector.load %arg6[%c17, %c0_1] : memref<18x128xf32, #tpu.memory_space<vmem>>, vector<1x128xf32>
    tpu.vector_store %arg6[%c17, %c0_1], %0 {strides = array<i32>} : memref<18x128xf32, #tpu.memory_space<vmem>>, vector<1x128xf32>,
    %c0_2 = arith.constant 0 : index
    %c0_3 = arith.constant 0 : index
    %c0_4 = arith.constant 0 : index
    %3 = vector.load %arg1[%c0_2, %c0_3, %c0_4] : memref<1x16x128xf32, #tpu.memory_space<vmem>>, vector<1x16x128xf32>
    %4 = vector.shape_cast %3 : vector<1x16x128xf32> to vector<16x128xf32>
    %c0_5 = arith.constant 0 : index
    %c0_6 = arith.constant 0 : index
    %5 = vector.load %arg3[%c0_5, %c0_6] : memref<2x128xf32, #tpu.memory_space<vmem>>, vector<1x128xf32>
    %c1 = arith.constant 1 : index
    %c0_7 = arith.constant 0 : index
    %6 = vector.load %arg6[%c1, %c0_7] : memref<18x128xf32, #tpu.memory_space<vmem>>, vector<16x128xf32>
    tpu.vector_store %arg6[%c1, %c0_7], %4 {strides = array<i32>} : memref<18x128xf32, #tpu.memory_space<vmem>>, vector<16x128xf32>,
    %c0_8 = arith.constant 0 : index
    %c0_9 = arith.constant 0 : index
    %7 = vector.load %arg6[%c0_8, %c0_9] : memref<18x128xf32, #tpu.memory_space<vmem>>, vector<16x128xf32>
    %c1_10 = arith.constant 1 : index
    %c0_11 = arith.constant 0 : index
    %8 = vector.load %arg6[%c1_10, %c0_11] : memref<18x128xf32, #tpu.memory_space<vmem>>, vector<16x128xf32>
    %c2 = arith.constant 2 : index
    %c0_12 = arith.constant 0 : index
    %9 = vector.load %arg6[%c2, %c0_12] : memref<18x128xf32, #tpu.memory_space<vmem>>, vector<16x128xf32>
    %10 = tpu.concatenate %7, %8, %9 in 1 : vector<16x128xf32>, vector<16x128xf32>, vector<16x128xf32> -> vector<16x384xf32>
    %c0_13 = arith.constant 0 : index
    %c0_14 = arith.constant 0 : index
    %11 = vector.load %arg2[%c0_13, %c0_14] : memref<384x128xf32, #tpu.memory_space<vmem>>, vector<384x128xf32>
    %cst_15 = arith.constant dense<0.000000e+00> : vector<16x128xf32>
    %12 = tpu.matmul %10, %11, %cst_15 {dimension_numbers = #tpu.dot_dimension_numbers<[1], [0], [0], [1], [0, 0, 1, 1], [], []>} : vector<16x384xf32>, vector<384x128xf32>, vector<16x128xf32> -> vector<16x128xf32>
    %13 = vector.broadcast %5 : vector<1x128xf32> to vector<16x128xf32>
    %14 = arith.mulf %12, %13 : vector<16x128xf32>
    %c0_16 = arith.constant 0 : index
    %c0_17 = arith.constant 0 : index
    %15 = vector.load %arg4[%c0_16, %c0_17] : memref<1x128xf32, #tpu.memory_space<vmem>>, vector<1x128xf32>
    %16 = vector.broadcast %15 : vector<1x128xf32> to vector<16x128xf32>
    %17 = arith.addf %14, %16 : vector<16x128xf32>
    %cst_18 = arith.constant 0.000000e+00 : f32
    %18 = vector.broadcast %cst_18 : f32 to vector<16x128xf32>
    %19 = arith.maximumf %17, %18 : vector<16x128xf32>
    %c1_19 = arith.constant 1 : index
    %c0_20 = arith.constant 0 : index
    %20 = vector.load %arg3[%c1_19, %c0_20] : memref<2x128xf32, #tpu.memory_space<vmem>>, vector<1x128xf32>
    %c1_21 = arith.constant 1 : index
    %c0_22 = arith.constant 0 : index
    %21 = vector.load %arg6[%c1_21, %c0_22] : memref<18x128xf32, #tpu.memory_space<vmem>>, vector<16x128xf32>
    tpu.vector_store %arg6[%c1_21, %c0_22], %19 {strides = array<i32>} : memref<18x128xf32, #tpu.memory_space<vmem>>, vector<16x128xf32>,
    %c0_23 = arith.constant 0 : index
    %c0_24 = arith.constant 0 : index
    %22 = vector.load %arg6[%c0_23, %c0_24] : memref<18x128xf32, #tpu.memory_space<vmem>>, vector<16x128xf32>
    %c1_25 = arith.constant 1 : index
    %c0_26 = arith.constant 0 : index
    %23 = vector.load %arg6[%c1_25, %c0_26] : memref<18x128xf32, #tpu.memory_space<vmem>>, vector<16x128xf32>
    %c2_27 = arith.constant 2 : index
    %c0_28 = arith.constant 0 : index
    %24 = vector.load %arg6[%c2_27, %c0_28] : memref<18x128xf32, #tpu.memory_space<vmem>>, vector<16x128xf32>
    %25 = tpu.concatenate %22, %23, %24 in 1 : vector<16x128xf32>, vector<16x128xf32>, vector<16x128xf32> -> vector<16x384xf32>
    %c0_29 = arith.constant 0 : index
    %c0_30 = arith.constant 0 : index
    %26 = vector.load %arg2[%c0_29, %c0_30] : memref<384x128xf32, #tpu.memory_space<vmem>>, vector<384x128xf32>
    %cst_31 = arith.constant dense<0.000000e+00> : vector<16x128xf32>
    %27 = tpu.matmul %25, %26, %cst_31 {dimension_numbers = #tpu.dot_dimension_numbers<[1], [0], [0], [1], [0, 0, 1, 1], [], []>} : vector<16x384xf32>, vector<384x128xf32>, vector<16x128xf32> -> vector<16x128xf32>
    %28 = vector.broadcast %20 : vector<1x128xf32> to vector<16x128xf32>
    %29 = arith.mulf %27, %28 : vector<16x128xf32>
    %c0_32 = arith.constant 0 : index
    %c0_33 = arith.constant 0 : index
    %30 = vector.load %arg4[%c0_32, %c0_33] : memref<1x128xf32, #tpu.memory_space<vmem>>, vector<1x128xf32>
    %31 = vector.broadcast %30 : vector<1x128xf32> to vector<16x128xf32>
    %32 = arith.addf %29, %31 : vector<16x128xf32>
    %cst_34 = arith.constant 0.000000e+00 : f32
    %33 = vector.broadcast %cst_34 : f32 to vector<16x128xf32>
    %34 = arith.maximumf %32, %33 : vector<16x128xf32>
    %c0_35 = arith.constant 0 : index
    %c0_36 = arith.constant 0 : index
    %c0_37 = arith.constant 0 : index
    %35 = vector.load %arg5[%c0_35, %c0_36, %c0_37] : memref<1x16x128xf32, #tpu.memory_space<vmem>>, vector<1x16x128xf32>
    %36 = vector.shape_cast %35 : vector<1x16x128xf32> to vector<16x128xf32>
    %37 = vector.shape_cast %34 : vector<16x128xf32> to vector<1x16x128xf32>
    tpu.vector_store %arg5[%c0_35, %c0_36, %c0_37], %37 {strides = array<i32>} : memref<1x16x128xf32, #tpu.memory_space<vmem>>, vector<1x16x128xf32>,
    return
  }
  func.func @transform_0(%arg0: i32) -> (i32, i32, i32) {
    %c0_i32 = arith.constant 0 : i32
    %c0_i32_0 = arith.constant 0 : i32
    %c0_i32_1 = arith.constant 0 : i32
    return %arg0, %c0_i32, %c0_i32_0 : i32, i32, i32
  }
  func.func @transform_1(%arg0: i32) -> (i32, i32) {
    %c0_i32 = arith.constant 0 : i32
    %c0_i32_0 = arith.constant 0 : i32
    %c0_i32_1 = arith.constant 0 : i32
    return %c0_i32, %c0_i32_0 : i32, i32
  }
  func.func @transform_2(%arg0: i32) -> (i32, i32) {
    %c0_i32 = arith.constant 0 : i32
    %c0_i32_0 = arith.constant 0 : i32
    %c0_i32_1 = arith.constant 0 : i32
    return %c0_i32, %c0_i32_0 : i32, i32
  }
  func.func @transform_3(%arg0: i32) -> (i32, i32) {
    %c0_i32 = arith.constant 0 : i32
    %c0_i32_0 = arith.constant 0 : i32
    %c0_i32_1 = arith.constant 0 : i32
    return %c0_i32, %c0_i32_0 : i32, i32
  }
  func.func @transform_4(%arg0: i32) -> (i32, i32, i32) {
    %c0_i32 = arith.constant 0 : i32
    %c0_i32_0 = arith.constant 0 : i32
    %c0_i32_1 = arith.constant 0 : i32
    return %arg0, %c0_i32, %c0_i32_0 : i32, i32, i32
  }
}

</mosaic_0001>

<llo_original>
// kernel: recurrent_block_forward.1
$region0: #{recurrent_block_forward.1}
  #allocation0 [shape = 'u32[]', space=smem, size = 0x4, offset = 0x4, fixed_abs, tag = 'smem constant byte address 0x4 - core index']
  #allocation1 [shape = 'u32[144,128]{1,0:T(1,128)}', space=vmem, size = 0x12000, scoped, tag = 'internal scratch']
  #allocation2 [shape = 'f32[18,128]{1,0:T(8,128)}', space=vmem, size = 0x3000, scoped, tag = 'scratch operand']
  %s0 = inlined_call_operand.vmem [shape: f32[2,16,128], index: 0, kind: input, shape index: {}]
  %s1 = inlined_call_operand.vmem [shape: f32[384,128], index: 1, kind: input, shape index: {}]
  %s2 = inlined_call_operand.vmem [shape: f32[2,128], index: 2, kind: input, shape index: {}]
  %s3 = inlined_call_operand.vmem [shape: f32[1,128], index: 3, kind: input, shape index: {}]
  %s4 = inlined_call_operand.vmem [shape: f32[2,16,128], index: 4, kind: output, shape index: {}]
  %s5 = sld [smem:[#allocation0]]
  $region49: #{recurrent_block_forward.1} parent=0
    _
  %s7 = ssub.s32 1, %s5
  %s8 = scalar_select 0, %s7, %s5
  loop: start=0, step=1, limit=4
  $region2: #{recurrent_block_forward.1} parent=0 // loop_pre_header
    _
  $region3: #{recurrent_block_forward.1} parent=0 // loop_header
    %s10 = sphi 0, %s14
    %p11 = scmp.ge.s32.totalorder %s10, 4
    %s20 = sphi 0, %s22
    %s23 = sphi 0, %s20
    %s24 = sphi 0, %s23
    %s40 = sphi 0, %s24
    %s44 = sphi 0, %s44
    %s46 = sphi 0, %s44
    %s47 = sphi 0, %s46
    %s61 = sphi 0, %s47
    %s65 = sphi 0, %s65
    %s67 = sphi 0, %s65
    %s68 = sphi 0, %s67
    %s82 = sphi 0, %s68
    %s86 = sphi 0, %s86
    %s88 = sphi 0, %s86
    %s89 = sphi 0, %s88
    %s103 = sphi 0, %s89
    %s109 = sphi 0, %s111
    %s112 = sphi 0, %s109
    %s113 = sphi 0, %s112
    %s129 = sphi 0, %s113
  $region4: #{recurrent_block_forward.1} parent=0 // loop_header_branch
    %13 = sbr.rel (%p11) target = $region8
  $region5: #{recurrent_block_forward.1} parent=0 // loop_body
    %s15 = ssub.s32 %s10, 1
    %s16 = ssub.s32 %s10, 2
    %s17 = sadd.s32 %s10, 1
    %s18 = ssub.s32 %s10, %s17
    %p19 = scmp.eq.s32.totalorder %s18, 0
    %s21 = sadd.s32 %s20, 1
    %s22 = scalar_select %p19, %s20, %s21
    %p25 = pneg %p19
    %p26 = scmp.eq.s32.totalorder %s10, 1
    %p27 = por %p25, %p26
    %p28 = scmp.ne.s32.totalorder %s20, %s23
    %p29 = scmp.eq.s32.totalorder %s10, 0
    %p30 = por %p28, %p29
    %p31 = scmp.ne.s32.totalorder %s20, %s23
    %p32 = scmp.eq.s32.totalorder %s15, 1
    %p33 = por %p31, %p32
    %p34 = scmp.ne.s32.totalorder %s23, %s24
    %p35 = scmp.eq.s32.totalorder %s15, 0
    %p36 = por %p34, %p35
    %p37 = scmp.ne.s32.totalorder %s23, %s24
    %p38 = scmp.eq.s32.totalorder %s16, 1
    %p39 = por %p37, %p38
    %p41 = scmp.ne.s32.totalorder %s24, %s40
    %p42 = scmp.eq.s32.totalorder %s16, 0
    %p43 = por %p41, %p42
    %s45 = sadd.s32 %s44, 1
    %p48 = scmp.eq.s32.totalorder %s10, 1
    %p49 = scmp.ne.s32.totalorder %s44, %s46
    %p50 = scmp.eq.s32.totalorder %s10, 0
    %p51 = por %p49, %p50
    %p52 = scmp.ne.s32.totalorder %s44, %s46
    %p53 = scmp.eq.s32.totalorder %s15, 1
    %p54 = por %p52, %p53
    %p55 = scmp.ne.s32.totalorder %s46, %s47
    %p56 = scmp.eq.s32.totalorder %s15, 0
    %p57 = por %p55, %p56
    %p58 = scmp.ne.s32.totalorder %s46, %s47
    %p59 = scmp.eq.s32.totalorder %s16, 1
    %p60 = por %p58, %p59
    %p62 = scmp.ne.s32.totalorder %s47, %s61
    %p63 = scmp.eq.s32.totalorder %s16, 0
    %p64 = por %p62, %p63
    %s66 = sadd.s32 %s65, 1
    %p69 = scmp.eq.s32.totalorder %s10, 1
    %p70 = scmp.ne.s32.totalorder %s65, %s67
    %p71 = scmp.eq.s32.totalorder %s10, 0
    %p72 = por %p70, %p71
    %p73 = scmp.ne.s32.totalorder %s65, %s67
    %p74 = scmp.eq.s32.totalorder %s15, 1
    %p75 = por %p73, %p74
    %p76 = scmp.ne.s32.totalorder %s67, %s68
    %p77 = scmp.eq.s32.totalorder %s15, 0
    %p78 = por %p76, %p77
    %p79 = scmp.ne.s32.totalorder %s67, %s68
    %p80 = scmp.eq.s32.totalorder %s16, 1
    %p81 = por %p79, %p80
    %p83 = scmp.ne.s32.totalorder %s68, %s82
    %p84 = scmp.eq.s32.totalorder %s16, 0
    %p85 = por %p83, %p84
    %s87 = sadd.s32 %s86, 1
    %p90 = scmp.eq.s32.totalorder %s10, 1
    %p91 = scmp.ne.s32.totalorder %s86, %s88
    %p92 = scmp.eq.s32.totalorder %s10, 0
    %p93 = por %p91, %p92
    %p94 = scmp.ne.s32.totalorder %s86, %s88
    %p95 = scmp.eq.s32.totalorder %s15, 1
    %p96 = por %p94, %p95
    %p97 = scmp.ne.s32.totalorder %s88, %s89
    %p98 = scmp.eq.s32.totalorder %s15, 0
    %p99 = por %p97, %p98
    %p100 = scmp.ne.s32.totalorder %s88, %s89
    %p101 = scmp.eq.s32.totalorder %s16, 1
    %p102 = por %p100, %p101
    %p104 = scmp.ne.s32.totalorder %s89, %s103
    %p105 = scmp.eq.s32.totalorder %s16, 0
    %p106 = por %p104, %p105
    %s107 = ssub.s32 %s10, %s17
    %p108 = scmp.eq.s32.totalorder %s107, 0
    %s110 = sadd.s32 %s109, 1
    %s111 = scalar_select %p108, %s109, %s110
    %p114 = pneg %p108
    %p115 = scmp.eq.s32.totalorder %s10, 1
    %p116 = por %p114, %p115
    %p117 = scmp.ne.s32.totalorder %s109, %s112
    %p118 = scmp.eq.s32.totalorder %s10, 0
    %p119 = por %p117, %p118
    %p120 = scmp.ne.s32.totalorder %s109, %s112
    %p121 = scmp.eq.s32.totalorder %s15, 1
    %p122 = por %p120, %p121
    %p123 = scmp.ne.s32.totalorder %s112, %s113
    %p124 = scmp.eq.s32.totalorder %s15, 0
    %p125 = por %p123, %p124
    %p126 = scmp.ne.s32.totalorder %s112, %s113
    %p127 = scmp.eq.s32.totalorder %s16, 1
    %p128 = por %p126, %p127
    %p130 = scmp.ne.s32.totalorder %s113, %s129
    %p131 = scmp.eq.s32.totalorder %s16, 0
    %p132 = por %p130, %p131
    %p133 = scmp.le.s32.totalorder 1, %s10
    %p134 = scmp.lt.s32.totalorder %s10, 3
    %p135 = pnand %p133, %p134
    %p136 = pneg %p135
    // Predicated region
    $region9: #{recurrent_block_forward.1} parent=5 // pred_check
      _
    $region10: #{recurrent_block_forward.1} parent=5 // pred_check_branch
      %138 = sbr.rel (%p135) target = $region12
    $region11: #{recurrent_block_forward.1} parent=5 // pred_region
      %s139 = ssub.s32 %s10, 1
      // Predicated region
      $region13: #{recurrent_block_forward.1} parent=11 // pred_check
        %p140 = pneg %p57
      $region14: #{recurrent_block_forward.1} parent=11 // pred_check_branch
        %142 = sbr.rel (%p140) target = $region16
      $region15: #{recurrent_block_forward.1} parent=11 // pred_region
        _
      $region16: #{recurrent_block_forward.1} parent=11 // pred_fallthru
        _
      // Predicated region
      $region17: #{recurrent_block_forward.1} parent=11 // pred_check
        %p143 = pneg %p78
      $region18: #{recurrent_block_forward.1} parent=11 // pred_check_branch
        %145 = sbr.rel (%p143) target = $region20
      $region19: #{recurrent_block_forward.1} parent=11 // pred_region
        _
      $region20: #{recurrent_block_forward.1} parent=11 // pred_fallthru
        _
      // Predicated region
      $region21: #{recurrent_block_forward.1} parent=11 // pred_check
        %p146 = pneg %p99
      $region22: #{recurrent_block_forward.1} parent=11 // pred_check_branch
        %148 = sbr.rel (%p146) target = $region24
      $region23: #{recurrent_block_forward.1} parent=11 // pred_region
        _
      $region24: #{recurrent_block_forward.1} parent=11 // pred_fallthru
        _
    $region12: #{recurrent_block_forward.1} parent=5 // pred_fallthru
      _
    %p149 = scmp.lt.s32.totalorder %s10, 2
    // Predicated region
    $region25: #{recurrent_block_forward.1} parent=5 // pred_check
      %p150 = pneg %p149
    $region26: #{recurrent_block_forward.1} parent=5 // pred_check_branch
      %152 = sbr.rel (%p150) target = $region28
    $region27: #{recurrent_block_forward.1} parent=5 // pred_region
      // Predicated region
      $region29: #{recurrent_block_forward.1} parent=27 // pred_check
        %p153 = pneg %p30
      $region30: #{recurrent_block_forward.1} parent=27 // pred_check_branch
        %155 = sbr.rel (%p153) target = $region32
      $region31: #{recurrent_block_forward.1} parent=27 // pred_region
        %p156 = scmp.lt.s32.totalorder %s10, 1
        %s157 = scalar_select %p156, %s10, 1
        %s158 = smul.addr %s157, 2
        %s159 = smul.addr %s158, 8
        %s160 = scalar_lea.vmem %s0, %s159
      $region32: #{recurrent_block_forward.1} parent=27 // pred_fallthru
        _
    $region28: #{recurrent_block_forward.1} parent=5 // pred_fallthru
      _
    %p161 = scmp.le.s32.totalorder 1, %s10
    %p162 = scmp.lt.s32.totalorder %s10, 3
    %p163 = pnand %p161, %p162
    %p164 = pneg %p163
    // Predicated region
    $region33: #{recurrent_block_forward.1} parent=5 // pred_check
      _
    $region34: #{recurrent_block_forward.1} parent=5 // pred_check_branch
      %166 = sbr.rel (%p163) target = $region36
    $region35: #{recurrent_block_forward.1} parent=5 // pred_region
      %s167 = ssub.s32 %s10, 1
      %p168 = scmp.lt.s32.totalorder %s15, 1
      %s169 = scalar_select %p168, %s15, 1
      %s170 = smul.addr %s169, 2
      %s171 = smul.addr %s170, 8
      %s172 = scalar_lea.vmem %s0, %s171
      %p173 = pneg %p36
      %p174 = pneg %p33
      %p175 = pneg %p57
      %p176 = pneg %p54
      %p177 = pneg %p78
      %p178 = pneg %p75
      %p179 = pneg %p99
      %p180 = pneg %p96
      %p181 = pneg %p125
      %p182 = pneg %p122
      %p183 = scmp.lt.s32.totalorder %s15, 1
      %s184 = scalar_select %p183, %s15, 1
      %s185 = smul.addr %s184, 2
      %s186 = smul.addr %s185, 8
      %s187 = scalar_lea.vmem %s4, %s186
      %p188 = scmp.lt.s32.totalorder %s15, 1
      %s189 = scalar_select %p188, %s15, 1
      %s190 = smul.addr %s189, 2
      %s191 = smul.addr %s190, 8
      %s192 = scalar_lea.vmem %s0, %s191
      %p193 = scmp.lt.s32.totalorder %s15, 1
      %s194 = scalar_select %p193, %s15, 1
      %s195 = smul.addr %s194, 2
      %s196 = smul.addr %s195, 8
      %s197 = scalar_lea.vmem %s4, %s196
      %198 = vst [vmem:[#allocation2] sm:$0x1] 0.0
      %199 = vst [vmem:[#allocation2 + $0x11] sm:$0x1] 0.0
      %v200 = vld [vmem:[%s192] sm:$0xff]
      %v201 = vld [vmem:[%s192 + $0x8] sm:$0xff]
      %v202 = vld [vmem:[%s2] sm:$0x1]
      %203 = vst [vmem:[#allocation2 + $0x1] sm:$0xff] %v200
      %204 = vst [vmem:[#allocation2 + $0x9] sm:$0xff] %v201
      %v205 = vld [vmem:[#allocation2] sm:$0xff]
      %v206 = vld [vmem:[#allocation2 + $0x8] sm:$0xff]
      %v207 = vld [vmem:[#allocation2 + $0x1] sm:$0xff]
      %v208 = vld [vmem:[#allocation2 + $0x9] sm:$0xff]
      %v209 = vld [vmem:[#allocation2 + $0x2] sm:$0xff]
      %v210 = vld [vmem:[#allocation2 + $0xa] sm:$0xff]
      %v211 = vld [vmem:[%s1] sm:$0xff]
      %v212 = vld [vmem:[%s1 + $0x8] sm:$0xff]
      %v213 = vld [vmem:[%s1 + $0x10] sm:$0xff]
      %v214 = vld [vmem:[%s1 + $0x18] sm:$0xff]
      %v215 = vld [vmem:[%s1 + $0x20] sm:$0xff]
      %v216 = vld [vmem:[%s1 + $0x28] sm:$0xff]
      %v217 = vld [vmem:[%s1 + $0x30] sm:$0xff]
      %v218 = vld [vmem:[%s1 + $0x38] sm:$0xff]
      %v219 = vld [vmem:[%s1 + $0x40] sm:$0xff]
      %v220 = vld [vmem:[%s1 + $0x48] sm:$0xff]
      %v221 = vld [vmem:[%s1 + $0x50] sm:$0xff]
      %v222 = vld [vmem:[%s1 + $0x58] sm:$0xff]
      %v223 = vld [vmem:[%s1 + $0x60] sm:$0xff]
      %v224 = vld [vmem:[%s1 + $0x68] sm:$0xff]
      %v225 = vld [vmem:[%s1 + $0x70] sm:$0xff]
      %v226 = vld [vmem:[%s1 + $0x78] sm:$0xff]
      %v227 = vld [vmem:[%s1 + $0x80] sm:$0xff]
      %v228 = vld [vmem:[%s1 + $0x88] sm:$0xff]
      %v229 = vld [vmem:[%s1 + $0x90] sm:$0xff]
      %v230 = vld [vmem:[%s1 + $0x98] sm:$0xff]
      %v231 = vld [vmem:[%s1 + $0xa0] sm:$0xff]
      %v232 = vld [vmem:[%s1 + $0xa8] sm:$0xff]
      %v233 = vld [vmem:[%s1 + $0xb0] sm:$0xff]
      %v234 = vld [vmem:[%s1 + $0xb8] sm:$0xff]
      %v235 = vld [vmem:[%s1 + $0xc0] sm:$0xff]
      %v236 = vld [vmem:[%s1 + $0xc8] sm:$0xff]
      %v237 = vld [vmem:[%s1 + $0xd0] sm:$0xff]
      %v238 = vld [vmem:[%s1 + $0xd8] sm:$0xff]
      %v239 = vld [vmem:[%s1 + $0xe0] sm:$0xff]
      %v240 = vld [vmem:[%s1 + $0xe8] sm:$0xff]
      %v241 = vld [vmem:[%s1 + $0xf0] sm:$0xff]
      %v242 = vld [vmem:[%s1 + $0xf8] sm:$0xff]
      %v243 = vld [vmem:[%s1 + $0x100] sm:$0xff]
      %v244 = vld [vmem:[%s1 + $0x108] sm:$0xff]
      %v245 = vld [vmem:[%s1 + $0x110] sm:$0xff]
      %v246 = vld [vmem:[%s1 + $0x118] sm:$0xff]
      %v247 = vld [vmem:[%s1 + $0x120] sm:$0xff]
      %v248 = vld [vmem:[%s1 + $0x128] sm:$0xff]
      %v249 = vld [vmem:[%s1 + $0x130] sm:$0xff]
      %v250 = vld [vmem:[%s1 + $0x138] sm:$0xff]
      %v251 = vld [vmem:[%s1 + $0x140] sm:$0xff]
      %v252 = vld [vmem:[%s1 + $0x148] sm:$0xff]
      %v253 = vld [vmem:[%s1 + $0x150] sm:$0xff]
      %v254 = vld [vmem:[%s1 + $0x158] sm:$0xff]
      %v255 = vld [vmem:[%s1 + $0x160] sm:$0xff]
      %v256 = vld [vmem:[%s1 + $0x168] sm:$0xff]
      %v257 = vld [vmem:[%s1 + $0x170] sm:$0xff]
      %v258 = vld [vmem:[%s1 + $0x178] sm:$0xff]
      %259 = vmatprep.subr.mxu0 0.0
      %260 = vmatpush1.msra.mxu0 %v211
      %261 = vmatprep.subr.mxu0 0.0
      %262 = vmatpush1.msra.mxu0 %v212
      %263 = vmatprep.subr.mxu0 0.0
      %264 = vmatpush1.msra.mxu0 %v213
      %265 = vmatprep.subr.mxu0 0.0
      %266 = vmatpush1.msra.mxu0 %v214
      %267 = vmatprep.subr.mxu0 0.0
      %268 = vmatpush1.msra.mxu0 %v215
      %269 = vmatprep.subr.mxu0 0.0
      %270 = vmatpush1.msra.mxu0 %v216
      %271 = vmatprep.subr.mxu0 0.0
      %272 = vmatpush1.msra.mxu0 %v217
      %273 = vmatprep.subr.mxu0 0.0
      %274 = vmatpush1.msra.mxu0 %v218
      %275 = vmatprep.subr.mxu0 0.0
      %276 = vmatpush1.msra.mxu0 %v219
      %277 = vmatprep.subr.mxu0 0.0
      %278 = vmatpush1.msra.mxu0 %v220
      %279 = vmatprep.subr.mxu0 0.0
      %280 = vmatpush1.msra.mxu0 %v221
      %281 = vmatprep.subr.mxu0 0.0
      %282 = vmatpush1.msra.mxu0 %v222
      %283 = vmatprep.subr.mxu0 0.0
      %284 = vmatpush1.msra.mxu0 %v223
      %285 = vmatprep.subr.mxu0 0.0
      %286 = vmatpush1.msra.mxu0 %v224
      %287 = vmatprep.subr.mxu0 0.0
      %288 = vmatpush1.msra.mxu0 %v225
      %289 = vmatprep.subr.mxu0 0.0
      %290 = vmatpush1.msra.mxu0 %v226
      %291 = vmatprep.subr.mxu0 0.0
      %292 = vmatpush1.msra.mxu0 %v227
      %293 = vmatprep.subr.mxu0 0.0
      %294 = vmatpush1.msra.mxu0 %v228
      %295 = vmatprep.subr.mxu0 0.0
      %296 = vmatpush1.msra.mxu0 %v229
      %297 = vmatprep.subr.mxu0 0.0
      %298 = vmatpush1.msra.mxu0 %v230
      %299 = vmatprep.subr.mxu0 0.0
      %300 = vmatpush1.msra.mxu0 %v231
      %301 = vmatprep.subr.mxu0 0.0
      %302 = vmatpush1.msra.mxu0 %v232
      %303 = vmatprep.subr.mxu0 0.0
      %304 = vmatpush1.msra.mxu0 %v233
      %305 = vmatprep.subr.mxu0 0.0
      %306 = vmatpush1.msra.mxu0 %v234
      %307 = vmatprep.subr.mxu0 0.0
      %308 = vmatpush1.msra.mxu0 %v235
      %309 = vmatprep.subr.mxu0 0.0
      %310 = vmatpush1.msra.mxu0 %v236
      %311 = vmatprep.subr.mxu0 0.0
      %312 = vmatpush1.msra.mxu0 %v237
      %313 = vmatprep.subr.mxu0 0.0
      %314 = vmatpush1.msra.mxu0 %v238
      %315 = vmatprep.subr.mxu0 0.0
      %316 = vmatpush1.msra.mxu0 %v239
      %317 = vmatprep.subr.mxu0 0.0
      %318 = vmatpush1.msra.mxu0 %v240
      %319 = vmatprep.subr.mxu0 0.0
      %320 = vmatpush1.msra.mxu0 %v241
      %321 = vmatprep.subr.mxu0 0.0
      %322 = vmatpush1.msra.mxu0 %v242
      %323 = vmatprep.mubr.f32.mxu0 %v207
      %324 = vmatmul.mubr.f32.gmra.mrb[0].mxu0 %v205
      %v325 = vpop.f32.mrb[0].mxu0
      %v326 = vadd.f32 0.0, %v325
      %v327 = vpop.f32.mrb[0].mxu0
      %328 = vmatprep.mubr.f32.mxu0 %v208
      %329 = vmatmul.mubr.f32.gmra.mrb[0].mxu0 %v206
      %v330 = vpop.f32.mrb[0].mxu0
      %v331 = vadd.f32 0.0, %v330
      %v332 = vpop.f32.mrb[0].mxu0
      %333 = vdwg.mxu0
      %334 = vmatprep.subr.mxu0 0.0
      %335 = vmatpush1.msra.mxu0 %v243
      %336 = vmatprep.subr.mxu0 0.0
      %337 = vmatpush1.msra.mxu0 %v244
      %338 = vmatprep.subr.mxu0 0.0
      %339 = vmatpush1.msra.mxu0 %v245
      %340 = vmatprep.subr.mxu0 0.0
      %341 = vmatpush1.msra.mxu0 %v246
      %342 = vmatprep.subr.mxu0 0.0
      %343 = vmatpush1.msra.mxu0 %v247
      %344 = vmatprep.subr.mxu0 0.0
      %345 = vmatpush1.msra.mxu0 %v248
      %346 = vmatprep.subr.mxu0 0.0
      %347 = vmatpush1.msra.mxu0 %v249
      %348 = vmatprep.subr.mxu0 0.0
      %349 = vmatpush1.msra.mxu0 %v250
      %350 = vmatprep.subr.mxu0 0.0
      %351 = vmatpush1.msra.mxu0 %v251
      %352 = vmatprep.subr.mxu0 0.0
      %353 = vmatpush1.msra.mxu0 %v252
      %354 = vmatprep.subr.mxu0 0.0
      %355 = vmatpush1.msra.mxu0 %v253
      %356 = vmatprep.subr.mxu0 0.0
      %357 = vmatpush1.msra.mxu0 %v254
      %358 = vmatprep.subr.mxu0 0.0
      %359 = vmatpush1.msra.mxu0 %v255
      %360 = vmatprep.subr.mxu0 0.0
      %361 = vmatpush1.msra.mxu0 %v256
      %362 = vmatprep.subr.mxu0 0.0
      %363 = vmatpush1.msra.mxu0 %v257
      %364 = vmatprep.subr.mxu0 0.0
      %365 = vmatpush1.msra.mxu0 %v258
      %366 = vmatprep.subr.mxu0 0.0
      %367 = vmatpush1.msra.mxu0 0.0
      %368 = vmatprep.subr.mxu0 0.0
      %369 = vmatpush1.msra.mxu0 0.0
      %370 = vmatprep.subr.mxu0 0.0
      %371 = vmatpush1.msra.mxu0 0.0
      %372 = vmatprep.subr.mxu0 0.0
      %373 = vmatpush1.msra.mxu0 0.0
      %374 = vmatprep.subr.mxu0 0.0
      %375 = vmatpush1.msra.mxu0 0.0
      %376 = vmatprep.subr.mxu0 0.0
      %377 = vmatpush1.msra.mxu0 0.0
      %378 = vmatprep.subr.mxu0 0.0
      %379 = vmatpush1.msra.mxu0 0.0
      %380 = vmatprep.subr.mxu0 0.0
      %381 = vmatpush1.msra.mxu0 0.0
      %382 = vmatprep.subr.mxu0 0.0
      %383 = vmatpush1.msra.mxu0 0.0
      %384 = vmatprep.subr.mxu0 0.0
      %385 = vmatpush1.msra.mxu0 0.0
      %386 = vmatprep.subr.mxu0 0.0
      %387 = vmatpush1.msra.mxu0 0.0
      %388 = vmatprep.subr.mxu0 0.0
      %389 = vmatpush1.msra.mxu0 0.0
      %390 = vmatprep.subr.mxu0 0.0
      %391 = vmatpush1.msra.mxu0 0.0
      %392 = vmatprep.subr.mxu0 0.0
      %393 = vmatpush1.msra.mxu0 0.0
      %394 = vmatprep.subr.mxu0 0.0
      %395 = vmatpush1.msra.mxu0 0.0
      %396 = vmatprep.subr.mxu0 0.0
      %397 = vmatpush1.msra.mxu0 0.0
      %398 = vmatprep.mubr.f32.mxu0 0.0
      %399 = vmatmul.mubr.f32.gmra.mrb[0].mxu0 %v209
      %v400 = vpop.f32.mrb[0].mxu0
      %v401 = vadd.f32 %v326, %v400
      %v402 = vpop.f32.mrb[0].mxu0
      %403 = vmatprep.mubr.f32.mxu0 0.0
      %404 = vmatmul.mubr.f32.gmra.mrb[0].mxu0 %v210
      %v405 = vpop.f32.mrb[0].mxu0
      %v406 = vadd.f32 %v331, %v405
      %v407 = vpop.f32.mrb[0].mxu0
      %408 = vdwg.mxu0
      %v409 = vlaneseq
      %v410 = vshrl.u32 %v409, 7
      %v411 = vsub.s32 0, %v410
      %v412 = vrot.slane %v202, %v411
      %v413 = vmul.f32 %v401, %v412
      %v414 = vmul.f32 %v406, %v412
      %v415 = vld [vmem:[%s3] sm:$0x1]
      %v417 = vlaneseq
      %v418 = vshrl.u32 %v417, 7
      %v419 = vsub.s32 0, %v418
      %v420 = vrot.slane %v415, %v419
      %v422 = vadd.f32 %v413, %v420
      %v423 = vadd.f32 %v414, %v420
      %v424 = vmax.f32 %v422, 0.0
      %v425 = vmax.f32 %v423, 0.0
      %v426 = vld [vmem:[%s2 + $0x1] sm:$0x1]
      %427 = vst [vmem:[#allocation2 + $0x1] sm:$0xff] %v424
      %428 = vst [vmem:[#allocation2 + $0x9] sm:$0xff] %v425
      %v429 = vld [vmem:[#allocation2] sm:$0xff]
      %v430 = vld [vmem:[#allocation2 + $0x8] sm:$0xff]
      %v431 = vld [vmem:[#allocation2 + $0x1] sm:$0xff]
      %v432 = vld [vmem:[#allocation2 + $0x9] sm:$0xff]
      %v433 = vld [vmem:[#allocation2 + $0x2] sm:$0xff]
      %v434 = vld [vmem:[#allocation2 + $0xa] sm:$0xff]
      %v435 = vld [vmem:[%s1] sm:$0xff]
      %v436 = vld [vmem:[%s1 + $0x8] sm:$0xff]
      %v437 = vld [vmem:[%s1 + $0x10] sm:$0xff]
      %v438 = vld [vmem:[%s1 + $0x18] sm:$0xff]
      %v439 = vld [vmem:[%s1 + $0x20] sm:$0xff]
      %v440 = vld [vmem:[%s1 + $0x28] sm:$0xff]
      %v441 = vld [vmem:[%s1 + $0x30] sm:$0xff]
      %v442 = vld [vmem:[%s1 + $0x38] sm:$0xff]
      %v443 = vld [vmem:[%s1 + $0x40] sm:$0xff]
      %v444 = vld [vmem:[%s1 + $0x48] sm:$0xff]
      %v445 = vld [vmem:[%s1 + $0x50] sm:$0xff]
      %v446 = vld [vmem:[%s1 + $0x58] sm:$0xff]
      %v447 = vld [vmem:[%s1 + $0x60] sm:$0xff]
      %v448 = vld [vmem:[%s1 + $0x68] sm:$0xff]
      %v449 = vld [vmem:[%s1 + $0x70] sm:$0xff]
      %v450 = vld [vmem:[%s1 + $0x78] sm:$0xff]
      %v451 = vld [vmem:[%s1 + $0x80] sm:$0xff]
      %v452 = vld [vmem:[%s1 + $0x88] sm:$0xff]
      %v453 = vld [vmem:[%s1 + $0x90] sm:$0xff]
      %v454 = vld [vmem:[%s1 + $0x98] sm:$0xff]
      %v455 = vld [vmem:[%s1 + $0xa0] sm:$0xff]
      %v456 = vld [vmem:[%s1 + $0xa8] sm:$0xff]
      %v457 = vld [vmem:[%s1 + $0xb0] sm:$0xff]
      %v458 = vld [vmem:[%s1 + $0xb8] sm:$0xff]
      %v459 = vld [vmem:[%s1 + $0xc0] sm:$0xff]
      %v460 = vld [vmem:[%s1 + $0xc8] sm:$0xff]
      %v461 = vld [vmem:[%s1 + $0xd0] sm:$0xff]
      %v462 = vld [vmem:[%s1 + $0xd8] sm:$0xff]
      %v463 = vld [vmem:[%s1 + $0xe0] sm:$0xff]
      %v464 = vld [vmem:[%s1 + $0xe8] sm:$0xff]
      %v465 = vld [vmem:[%s1 + $0xf0] sm:$0xff]
      %v466 = vld [vmem:[%s1 + $0xf8] sm:$0xff]
      %v467 = vld [vmem:[%s1 + $0x100] sm:$0xff]
      %v468 = vld [vmem:[%s1 + $0x108] sm:$0xff]
      %v469 = vld [vmem:[%s1 + $0x110] sm:$0xff]
      %v470 = vld [vmem:[%s1 + $0x118] sm:$0xff]
      %v471 = vld [vmem:[%s1 + $0x120] sm:$0xff]
      %v472 = vld [vmem:[%s1 + $0x128] sm:$0xff]
      %v473 = vld [vmem:[%s1 + $0x130] sm:$0xff]
      %v474 = vld [vmem:[%s1 + $0x138] sm:$0xff]
      %v475 = vld [vmem:[%s1 + $0x140] sm:$0xff]
      %v476 = vld [vmem:[%s1 + $0x148] sm:$0xff]
      %v477 = vld [vmem:[%s1 + $0x150] sm:$0xff]
      %v478 = vld [vmem:[%s1 + $0x158] sm:$0xff]
      %v479 = vld [vmem:[%s1 + $0x160] sm:$0xff]
      %v480 = vld [vmem:[%s1 + $0x168] sm:$0xff]
      %v481 = vld [vmem:[%s1 + $0x170] sm:$0xff]
      %v482 = vld [vmem:[%s1 + $0x178] sm:$0xff]
      %483 = vmatprep.subr.mxu0 0.0
      %484 = vmatpush1.msra.mxu0 %v435
      %485 = vmatprep.subr.mxu0 0.0
      %486 = vmatpush1.msra.mxu0 %v436
      %487 = vmatprep.subr.mxu0 0.0
      %488 = vmatpush1.msra.mxu0 %v437
      %489 = vmatprep.subr.mxu0 0.0
      %490 = vmatpush1.msra.mxu0 %v438
      %491 = vmatprep.subr.mxu0 0.0
      %492 = vmatpush1.msra.mxu0 %v439
      %493 = vmatprep.subr.mxu0 0.0
      %494 = vmatpush1.msra.mxu0 %v440
      %495 = vmatprep.subr.mxu0 0.0
      %496 = vmatpush1.msra.mxu0 %v441
      %497 = vmatprep.subr.mxu0 0.0
      %498 = vmatpush1.msra.mxu0 %v442
      %499 = vmatprep.subr.mxu0 0.0
      %500 = vmatpush1.msra.mxu0 %v443
      %501 = vmatprep.subr.mxu0 0.0
      %502 = vmatpush1.msra.mxu0 %v444
      %503 = vmatprep.subr.mxu0 0.0
      %504 = vmatpush1.msra.mxu0 %v445
      %505 = vmatprep.subr.mxu0 0.0
      %506 = vmatpush1.msra.mxu0 %v446
      %507 = vmatprep.subr.mxu0 0.0
      %508 = vmatpush1.msra.mxu0 %v447
      %509 = vmatprep.subr.mxu0 0.0
      %510 = vmatpush1.msra.mxu0 %v448
      %511 = vmatprep.subr.mxu0 0.0
      %512 = vmatpush1.msra.mxu0 %v449
      %513 = vmatprep.subr.mxu0 0.0
      %514 = vmatpush1.msra.mxu0 %v450
      %515 = vmatprep.subr.mxu0 0.0
      %516 = vmatpush1.msra.mxu0 %v451
      %517 = vmatprep.subr.mxu0 0.0
      %518 = vmatpush1.msra.mxu0 %v452
      %519 = vmatprep.subr.mxu0 0.0
      %520 = vmatpush1.msra.mxu0 %v453
      %521 = vmatprep.subr.mxu0 0.0
      %522 = vmatpush1.msra.mxu0 %v454
      %523 = vmatprep.subr.mxu0 0.0
      %524 = vmatpush1.msra.mxu0 %v455
      %525 = vmatprep.subr.mxu0 0.0
      %526 = vmatpush1.msra.mxu0 %v456
      %527 = vmatprep.subr.mxu0 0.0
      %528 = vmatpush1.msra.mxu0 %v457
      %529 = vmatprep.subr.mxu0 0.0
      %530 = vmatpush1.msra.mxu0 %v458
      %531 = vmatprep.subr.mxu0 0.0
      %532 = vmatpush1.msra.mxu0 %v459
      %533 = vmatprep.subr.mxu0 0.0
      %534 = vmatpush1.msra.mxu0 %v460
      %535 = vmatprep.subr.mxu0 0.0
      %536 = vmatpush1.msra.mxu0 %v461
      %537 = vmatprep.subr.mxu0 0.0
      %538 = vmatpush1.msra.mxu0 %v462
      %539 = vmatprep.subr.mxu0 0.0
      %540 = vmatpush1.msra.mxu0 %v463
      %541 = vmatprep.subr.mxu0 0.0
      %542 = vmatpush1.msra.mxu0 %v464
      %543 = vmatprep.subr.mxu0 0.0
      %544 = vmatpush1.msra.mxu0 %v465
      %545 = vmatprep.subr.mxu0 0.0
      %546 = vmatpush1.msra.mxu0 %v466
      %547 = vmatprep.mubr.f32.mxu0 %v431
      %548 = vmatmul.mubr.f32.gmra.mrb[0].mxu0 %v429
      %v549 = vpop.f32.mrb[0].mxu0
      %v550 = vadd.f32 0.0, %v549
      %v551 = vpop.f32.mrb[0].mxu0
      %552 = vmatprep.mubr.f32.mxu0 %v432
      %553 = vmatmul.mubr.f32.gmra.mrb[0].mxu0 %v430
      %v554 = vpop.f32.mrb[0].mxu0
      %v555 = vadd.f32 0.0, %v554
      %v556 = vpop.f32.mrb[0].mxu0
      %557 = vdwg.mxu0
      %558 = vmatprep.subr.mxu0 0.0
      %559 = vmatpush1.msra.mxu0 %v467
      %560 = vmatprep.subr.mxu0 0.0
      %561 = vmatpush1.msra.mxu0 %v468
      %562 = vmatprep.subr.mxu0 0.0
      %563 = vmatpush1.msra.mxu0 %v469
      %564 = vmatprep.subr.mxu0 0.0
      %565 = vmatpush1.msra.mxu0 %v470
      %566 = vmatprep.subr.mxu0 0.0
      %567 = vmatpush1.msra.mxu0 %v471
      %568 = vmatprep.subr.mxu0 0.0
      %569 = vmatpush1.msra.mxu0 %v472
      %570 = vmatprep.subr.mxu0 0.0
      %571 = vmatpush1.msra.mxu0 %v473
      %572 = vmatprep.subr.mxu0 0.0
      %573 = vmatpush1.msra.mxu0 %v474
      %574 = vmatprep.subr.mxu0 0.0
      %575 = vmatpush1.msra.mxu0 %v475
      %576 = vmatprep.subr.mxu0 0.0
      %577 = vmatpush1.msra.mxu0 %v476
      %578 = vmatprep.subr.mxu0 0.0
      %579 = vmatpush1.msra.mxu0 %v477
      %580 = vmatprep.subr.mxu0 0.0
      %581 = vmatpush1.msra.mxu0 %v478
      %582 = vmatprep.subr.mxu0 0.0
      %583 = vmatpush1.msra.mxu0 %v479
      %584 = vmatprep.subr.mxu0 0.0
      %585 = vmatpush1.msra.mxu0 %v480
      %586 = vmatprep.subr.mxu0 0.0
      %587 = vmatpush1.msra.mxu0 %v481
      %588 = vmatprep.subr.mxu0 0.0
      %589 = vmatpush1.msra.mxu0 %v482
      %590 = vmatprep.subr.mxu0 0.0
      %591 = vmatpush1.msra.mxu0 0.0
      %592 = vmatprep.subr.mxu0 0.0
      %593 = vmatpush1.msra.mxu0 0.0
      %594 = vmatprep.subr.mxu0 0.0
      %595 = vmatpush1.msra.mxu0 0.0
      %596 = vmatprep.subr.mxu0 0.0
      %597 = vmatpush1.msra.mxu0 0.0
      %598 = vmatprep.subr.mxu0 0.0
      %599 = vmatpush1.msra.mxu0 0.0
      %600 = vmatprep.subr.mxu0 0.0
      %601 = vmatpush1.msra.mxu0 0.0
      %602 = vmatprep.subr.mxu0 0.0
      %603 = vmatpush1.msra.mxu0 0.0
      %604 = vmatprep.subr.mxu0 0.0
      %605 = vmatpush1.msra.mxu0 0.0
      %606 = vmatprep.subr.mxu0 0.0
      %607 = vmatpush1.msra.mxu0 0.0
      %608 = vmatprep.subr.mxu0 0.0
      %609 = vmatpush1.msra.mxu0 0.0
      %610 = vmatprep.subr.mxu0 0.0
      %611 = vmatpush1.msra.mxu0 0.0
      %612 = vmatprep.subr.mxu0 0.0
      %613 = vmatpush1.msra.mxu0 0.0
      %614 = vmatprep.subr.mxu0 0.0
      %615 = vmatpush1.msra.mxu0 0.0
      %616 = vmatprep.subr.mxu0 0.0
      %617 = vmatpush1.msra.mxu0 0.0
      %618 = vmatprep.subr.mxu0 0.0
      %619 = vmatpush1.msra.mxu0 0.0
      %620 = vmatprep.subr.mxu0 0.0
      %621 = vmatpush1.msra.mxu0 0.0
      %622 = vmatprep.mubr.f32.mxu0 0.0
      %623 = vmatmul.mubr.f32.gmra.mrb[0].mxu0 %v433
      %v624 = vpop.f32.mrb[0].mxu0
      %v625 = vadd.f32 %v550, %v624
      %v626 = vpop.f32.mrb[0].mxu0
      %627 = vmatprep.mubr.f32.mxu0 0.0
      %628 = vmatmul.mubr.f32.gmra.mrb[0].mxu0 %v434
      %v629 = vpop.f32.mrb[0].mxu0
      %v630 = vadd.f32 %v555, %v629
      %v631 = vpop.f32.mrb[0].mxu0
      %632 = vdwg.mxu0
      %v633 = vlaneseq
      %v634 = vshrl.u32 %v633, 7
      %v635 = vsub.s32 0, %v634
      %v636 = vrot.slane %v426, %v635
      %v637 = vmul.f32 %v625, %v636
      %v638 = vmul.f32 %v630, %v636
      %v639 = vld [vmem:[%s3] sm:$0x1]
      %v641 = vlaneseq
      %v642 = vshrl.u32 %v641, 7
      %v643 = vsub.s32 0, %v642
      %v644 = vrot.slane %v639, %v643
      %v646 = vadd.f32 %v637, %v644
      %v647 = vadd.f32 %v638, %v644
      %v648 = vmax.f32 %v646, 0.0
      %v649 = vmax.f32 %v647, 0.0
      %650 = vst [vmem:[%s197] sm:$0xff] %v648
      %651 = vst [vmem:[%s197 + $0x8] sm:$0xff] %v649
      %p652 = scmp.lt.s32.totalorder %s15, 1
      %s653 = scalar_select %p652, %s15, 1
      %s654 = smul.addr %s653, 2
      %s655 = smul.addr %s654, 8
      %s656 = scalar_lea.vmem %s4, %s655
      // Predicated region
      $region37: #{recurrent_block_forward.1} parent=35 // pred_check
        %p657 = pneg %p122
      $region38: #{recurrent_block_forward.1} parent=35 // pred_check_branch
        %659 = sbr.rel (%p657) target = $region40
      $region39: #{recurrent_block_forward.1} parent=35 // pred_region
        _
      $region40: #{recurrent_block_forward.1} parent=35 // pred_fallthru
        _
    $region36: #{recurrent_block_forward.1} parent=5 // pred_fallthru
      _
    %p660 = scmp.le.s32.totalorder 2, %s10
    // Predicated region
    $region41: #{recurrent_block_forward.1} parent=5 // pred_check
      %p661 = pneg %p660
    $region42: #{recurrent_block_forward.1} parent=5 // pred_check_branch
      %663 = sbr.rel (%p661) target = $region44
    $region43: #{recurrent_block_forward.1} parent=5 // pred_region
      %s664 = ssub.s32 %s10, 2
      // Predicated region
      $region45: #{recurrent_block_forward.1} parent=43 // pred_check
        %p665 = pneg %p128
      $region46: #{recurrent_block_forward.1} parent=43 // pred_check_branch
        %667 = sbr.rel (%p665) target = $region48
      $region47: #{recurrent_block_forward.1} parent=43 // pred_region
        %p668 = scmp.lt.s32.totalorder %s16, 1
        %s669 = scalar_select %p668, %s16, 1
        %s670 = smul.addr %s669, 2
        %s671 = smul.addr %s670, 8
        %s672 = scalar_lea.vmem %s4, %s671
      $region48: #{recurrent_block_forward.1} parent=43 // pred_fallthru
        _
    $region44: #{recurrent_block_forward.1} parent=5 // pred_fallthru
      _
  $region6: #{recurrent_block_forward.1} parent=0 // loop_footer
    %s14 = sadd.s32 1, %s10
  $region7: #{recurrent_block_forward.1} parent=0 // loop_footer_branch
    %9 = sbr.rel target = $region3
  $region8: #{recurrent_block_forward.1} parent=0 // loop_exit
    _

</llo_original>
